<compile_context>
chip_gen: v7x
topology: tpu7x:2x2x1
jax: 0.10.0
libtpu: 0.0.40
codegen_flags: <defaults>
</compile_context>

<pallas_src>
import jax
import jax.numpy as jnp
from jax.experimental import pallas as pl
from jax.experimental.pallas import tpu as pltpu


def residual_block_kernel(x_ref, halo_ref, wdw_ref, bdw_ref,
                          w2_ref, b2_ref, w3_ref, b3_ref,
                          o_ref, win_ref):
    """One (batch, time-tile) grid step; everything in (C, T) layout.

    x_ref   : (1, C, tT)    bf16 activation tile (also the identity shortcut)
    halo_ref: (1, 1, C, K-1) f32  [pad_l left cols | pad_r right cols]
    wdw_ref : (C, K) f32    depthwise weights, BatchNorm folded in
    bdw_ref : (C, 1) f32    depthwise bias,    BatchNorm folded in
    w2_ref  : (H, C) bf16   1x1 conv2 weight;  b2_ref: (H, 1) f32
    w3_ref  : (C, H) bf16   1x1 conv3 weight, LayerScale folded in
    b3_ref  : (C, 1) f32    conv3 bias,        LayerScale folded in
    o_ref   : (1, C, tT)    output tile
    win_ref : (C, tT+K-1) f32 VMEM scratch holding the halo'd window
    """
    C, tT = x_ref.shape[1], x_ref.shape[2]
    K = wdw_ref.shape[1]
    pad_l = (K - 1) // 2

    xt = x_ref[0].astype(jnp.float32)          # (C, tT) — also the shortcut
    halo = halo_ref[0, 0]                      # (C, K-1) f32

    # Assemble the halo'd window [left | tile | right] in VMEM scratch.
    win_ref[:, pad_l:pad_l + tT] = xt
    if pad_l > 0:
        win_ref[:, :pad_l] = halo[:, :pad_l]
    if K - 1 - pad_l > 0:
        win_ref[:, pad_l + tT:] = halo[:, pad_l:]

    # conv1: depthwise (BatchNorm already folded into wdw/bdw), f32 VPU math.
    wdw = wdw_ref[...]                         # (C, K)
    h = bdw_ref[...]                           # (C, 1) -> broadcasts on first add
    for k in range(K):                         # K static -> unrolled
        h = h + wdw[:, k:k + 1] * win_ref[:, k:k + tT]

    # conv2 (1x1) + ReLU: (H, C) @ (C, tT) on the MXU, f32 accumulation.
    h2 = jnp.dot(w2_ref[...], h.astype(w2_ref.dtype),
                 preferred_element_type=jnp.float32)
    h2 = jnp.maximum(h2 + b2_ref[...], 0.0)

    # conv3 (1x1) with LayerScale folded in; dropout = identity in eval mode.
    h3 = jnp.dot(w3_ref[...], h2.astype(w3_ref.dtype),
                 preferred_element_type=jnp.float32)
    h3 = h3 + b3_ref[...]

    # Identity shortcut from the same tile; lane-dense (tT >= 128) store.
    o_ref[0] = (h3 + xt).astype(o_ref.dtype)


def _pick_time_tile(T, max_tile):
    """Largest multiple of 128 that divides T and is <= max_tile; else T."""
    cand = min(T, max_tile)
    cand -= cand % 128
    while cand >= 128:
        if T % cand == 0:
            return cand
        cand -= 128
    return T


def _build_halo(x, tT, pad_l, pad_r):
    """Per-time-tile halo columns, shape (B, nT, C, pad_l + pad_r), f32.

    Tile i of the depthwise conv needs input columns
    [i*tT - pad_l, i*tT + tT + pad_r); the K-1 columns falling outside the
    tile are gathered here (zeros at the sequence edges), so the main time
    tiles can be DMA'd without any overlap or full padded copy of x.
    """
    x = x.astype(jnp.float32)
    B, C, T = x.shape
    nT = T // tT
    zcol = jnp.zeros((B, C, 1), jnp.float32)
    cols = []
    for d in range(pad_l, 0, -1):                 # offsets -d from tile start
        inner = x[:, :, tT - d:T - d:tT]                       # tiles 1..nT-1
        cols.append(jnp.concatenate([zcol, inner], axis=2))    # (B, C, nT)
    for d in range(pad_r):                        # offsets tT + d
        inner = x[:, :, tT + d::tT][:, :, :nT - 1]             # tiles 0..nT-2
        cols.append(jnp.concatenate([inner, zcol], axis=2))    # (B, C, nT)
    halo = jnp.stack(cols, axis=-1)                            # (B, C, nT, K-1)
    return jnp.transpose(halo, (0, 2, 1, 3))                   # (B, nT, C, K-1)


def residual_block(x, params, *, max_time_tile=512):
    """Fused ResidualBlock forward.

    x: (B, C, T) activation in native BCT layout (bf16 recommended).
    params: output of fold_params() (BN folded into conv1, LayerScale into conv3).
    """
    B, C, T = x.shape
    wdw, bdw = params["wdw"], params["bdw"]
    w2, b2, w3, b3 = params["w2"], params["b2"], params["w3"], params["b3"]
    K = wdw.shape[1]
    assert K >= 2, "kernel_size >= 2 expected"
    H = w2.shape[0]
    pad_l = (K - 1) // 2
    pad_r = K - 1 - pad_l

    # Time tile: multiple of 128 (lane-dense stores). Blocks at these channel
    # counts are tiny, comfortably inside v7x's 64 MiB VMEM with double
    # buffering, so no explicit vmem_limit_bytes is needed.
    tT = _pick_time_tile(T, max_time_tile)
    nT = T // tT
    halo = _build_halo(x, tT, pad_l, pad_r)        # (B, nT, C, K-1), tiny
    W = K - 1

    return pl.pallas_call(
        residual_block_kernel,
        out_shape=jax.ShapeDtypeStruct((B, C, T), x.dtype),
        grid_spec=pltpu.PrefetchScalarGridSpec(
            num_scalar_prefetch=0,
            grid=(B, nT),
            in_specs=[
                pl.BlockSpec((1, C, tT), lambda b, i: (b, 0, i)),      # x tile
                pl.BlockSpec((1, 1, C, W), lambda b, i: (b, i, 0, 0)), # halo
                pl.BlockSpec((C, K), lambda b, i: (0, 0)),             # wdw (BN folded)
                pl.BlockSpec((C, 1), lambda b, i: (0, 0)),             # bdw (BN folded)
                pl.BlockSpec((H, C), lambda b, i: (0, 0)),             # w2
                pl.BlockSpec((H, 1), lambda b, i: (0, 0)),             # b2
                pl.BlockSpec((C, H), lambda b, i: (0, 0)),             # w3 (LS folded)
                pl.BlockSpec((C, 1), lambda b, i: (0, 0)),             # b3 (LS folded)
            ],
            out_specs=pl.BlockSpec((1, C, tT), lambda b, i: (b, 0, i)),
            scratch_shapes=[pltpu.VMEM((C, tT + K - 1), jnp.float32)],
        ),
        compiler_params=pltpu.CompilerParams(
            dimension_semantics=("parallel", "parallel")),
    )(x, halo, wdw, bdw, w2, b2, w3, b3)


def make_torch_params(key, C, H, K, ls_eps=0.1):
    """Parameters mirroring the PyTorch module (eval mode), f32, torch layouts."""
    ks = jax.random.split(key, 10)
    return dict(
        w_dw=0.2 * jax.random.normal(ks[0], (C, K), jnp.float32),   # conv1 (C,1,K)
        b_dw=0.1 * jax.random.normal(ks[1], (C,), jnp.float32),
        gamma=1.0 + 0.1 * jax.random.normal(ks[2], (C,), jnp.float32),  # BatchNorm1d
        beta=0.1 * jax.random.normal(ks[3], (C,), jnp.float32),
        running_mean=0.1 * jax.random.normal(ks[4], (C,), jnp.float32),
        running_var=jnp.exp(0.2 * jax.random.normal(ks[5], (C,), jnp.float32)),
        w2=0.2 * jax.random.normal(ks[6], (H, C), jnp.float32),     # conv2 (H,C,1)
        b2=0.1 * jax.random.normal(ks[7], (H,), jnp.float32),
        w3=0.2 * jax.random.normal(ks[8], (C, H), jnp.float32),     # conv3 (C,H,1)
        b3=0.1 * jax.random.normal(ks[9], (C,), jnp.float32),
        ls=ls_eps * jnp.ones((C,), jnp.float32),                    # LayerScale gamma
    )


def fold_params(p, bn_eps=1e-5, matmul_dtype=jnp.bfloat16):
    """Fold BatchNorm(eval) into conv1 and LayerScale into conv3; narrow the
    1x1 MXU weights to bf16 (accumulation stays f32 inside the kernel)."""
    bn_scale = p["gamma"] / jnp.sqrt(p["running_var"] + bn_eps)          # (C,)
    bn_shift = p["beta"] - p["running_mean"] * bn_scale
    return dict(
        wdw=(bn_scale[:, None] * p["w_dw"]).astype(jnp.float32),         # (C, K)
        bdw=(bn_scale * p["b_dw"] + bn_shift)[:, None].astype(jnp.float32),  # (C, 1)
        w2=p["w2"].astype(matmul_dtype),                                 # (H, C)
        b2=p["b2"][:, None].astype(jnp.float32),                         # (H, 1)
        w3=(p["ls"][:, None] * p["w3"]).astype(matmul_dtype),            # (C, H)
        b3=(p["ls"] * p["b3"])[:, None].astype(jnp.float32),             # (C, 1)
    )


def reference(x, p, bn_eps=1e-5):
    """Pure-JAX f32 reference of the original (unfolded) module, BCT layout."""
    B, C, T = x.shape
    K = p["w_dw"].shape[1]
    pad_l = (K - 1) // 2
    pad_r = K - 1 - pad_l
    xp = jnp.pad(x, ((0, 0), (0, 0), (pad_l, pad_r)))
    h = sum(p["w_dw"][None, :, k:k + 1] * xp[:, :, k:k + T] for k in range(K))
    h = h + p["b_dw"][None, :, None]
    bn_scale = p["gamma"] / jnp.sqrt(p["running_var"] + bn_eps)
    bn_shift = p["beta"] - p["running_mean"] * bn_scale
    h = bn_scale[None, :, None] * h + bn_shift[None, :, None]
    h = jnp.maximum(jnp.einsum("hc,bct->bht", p["w2"], h) + p["b2"][None, :, None], 0.0)
    h = jnp.einsum("ch,bht->bct", p["w3"], h) + p["b3"][None, :, None]
    return p["ls"][None, :, None] * h + x


if __name__ == "__main__":
    B, C, T = 2, 16, 1024        # in_channels = 16, sequence length = 1024
    H, K = 32, 3                 # hidden_channels = 32, kernel_size = 3

    key = jax.random.PRNGKey(0)
    kx, kp = jax.random.split(key)
    x_f32 = jax.random.normal(kx, (B, C, T), jnp.float32)   # BCT, like PyTorch
    torch_params = make_torch_params(kp, C, H, K)

    # bf16 activations at the kernel boundary (an upstream layer would already
    # emit bf16); all accumulation inside the kernel remains f32.
    x_bf16 = x_f32.astype(jnp.bfloat16)
    kparams = fold_params(torch_params)

    out = residual_block(x_bf16, kparams)      # grid = (B=2, time tiles=2)
    out = jax.block_until_ready(out)

    ref = reference(x_f32, torch_params)
    assert out.shape == (B, C, T)
    err = float(jnp.max(jnp.abs(out.astype(jnp.float32) - ref)))
    assert err < 5e-2, f"max abs error {err}"   # bf16 activations -> loosened tol
    print("KERNEL_OK")
</pallas_src>

<mosaic_0001>
module attributes {stable_mosaic.version = 11 : i64} {
  func.func @residual_block_kernel(%arg0: i32, %arg1: i32, %arg2: memref<1x16x512xbf16, #tpu.memory_space<vmem>>, %arg3: memref<1x1x16x2xf32, #tpu.memory_space<vmem>>, %arg4: memref<16x3xf32, #tpu.memory_space<vmem>>, %arg5: memref<16x1xf32, #tpu.memory_space<vmem>>, %arg6: memref<32x16xbf16, #tpu.memory_space<vmem>>, %arg7: memref<32x1xf32, #tpu.memory_space<vmem>>, %arg8: memref<16x32xbf16, #tpu.memory_space<vmem>>, %arg9: memref<16x1xf32, #tpu.memory_space<vmem>>, %arg10: memref<1x16x512xbf16, #tpu.memory_space<vmem>>, %arg11: memref<16x514xf32, #tpu.memory_space<vmem>>) attributes {dimension_semantics = [#tpu.dimension_semantics<parallel>, #tpu.dimension_semantics<parallel>], iteration_bounds = array<i64: 2, 2>, scalar_prefetch = 0 : i64, scratch_operands = 1 : i64, tpu.core_type = #tpu.core_type<tc>, window_params = [{transform_indices = @transform_0, window_bounds = array<i64: 1, 16, 512>}, {transform_indices = @transform_1, window_bounds = array<i64: 1, 1, 16, 2>}, {pipeline_mode = #tpu.pipeline_mode<synchronous>, transform_indices = @transform_2, window_bounds = array<i64: 16, 3>}, {pipeline_mode = #tpu.pipeline_mode<synchronous>, transform_indices = @transform_3, window_bounds = array<i64: 16, 1>}, {pipeline_mode = #tpu.pipeline_mode<synchronous>, transform_indices = @transform_4, window_bounds = array<i64: 32, 16>}, {pipeline_mode = #tpu.pipeline_mode<synchronous>, transform_indices = @transform_5, window_bounds = array<i64: 32, 1>}, {pipeline_mode = #tpu.pipeline_mode<synchronous>, transform_indices = @transform_6, window_bounds = array<i64: 16, 32>}, {pipeline_mode = #tpu.pipeline_mode<synchronous>, transform_indices = @transform_7, window_bounds = array<i64: 16, 1>}, {transform_indices = @transform_8, window_bounds = array<i64: 1, 16, 512>}]} {
    %c0 = arith.constant 0 : index
    %c0_0 = arith.constant 0 : index
    %c0_1 = arith.constant 0 : index
    %0 = vector.load %arg2[%c0, %c0_0, %c0_1] : memref<1x16x512xbf16, #tpu.memory_space<vmem>>, vector<1x16x512xbf16>
    %1 = vector.shape_cast %0 : vector<1x16x512xbf16> to vector<16x512xbf16>
    %2 = arith.extf %1 : vector<16x512xbf16> to vector<16x512xf32>
    %c0_2 = arith.constant 0 : index
    %c0_3 = arith.constant 0 : index
    %c0_4 = arith.constant 0 : index
    %c0_5 = arith.constant 0 : index
    %3 = vector.load %arg3[%c0_2, %c0_3, %c0_4, %c0_5] : memref<1x1x16x2xf32, #tpu.memory_space<vmem>>, vector<1x1x16x2xf32>
    %4 = vector.shape_cast %3 : vector<1x1x16x2xf32> to vector<16x2xf32>
    %c0_6 = arith.constant 0 : index
    %c1 = arith.constant 1 : index
    %5 = vector.load %arg11[%c0_6, %c1] : memref<16x514xf32, #tpu.memory_space<vmem>>, vector<16x512xf32>
    tpu.vector_store %arg11[%c0_6, %c1], %2 {strides = array<i32>} : memref<16x514xf32, #tpu.memory_space<vmem>>, vector<16x512xf32>,
    %6 = vector.extract_strided_slice %4 {offsets = [0, 0], sizes = [16, 1], strides = [1, 1]} : vector<16x2xf32> to vector<16x1xf32>
    %c0_7 = arith.constant 0 : index
    %c0_8 = arith.constant 0 : index
    %7 = vector.load %arg11[%c0_7, %c0_8] : memref<16x514xf32, #tpu.memory_space<vmem>>, vector<16x1xf32>
    tpu.vector_store %arg11[%c0_7, %c0_8], %6 {strides = array<i32>} : memref<16x514xf32, #tpu.memory_space<vmem>>, vector<16x1xf32>,
    %8 = vector.extract_strided_slice %4 {offsets = [0, 1], sizes = [16, 1], strides = [1, 1]} : vector<16x2xf32> to vector<16x1xf32>
    %c0_9 = arith.constant 0 : index
    %c513 = arith.constant 513 : index
    %9 = vector.load %arg11[%c0_9, %c513] : memref<16x514xf32, #tpu.memory_space<vmem>>, vector<16x1xf32>
    tpu.vector_store %arg11[%c0_9, %c513], %8 {strides = array<i32>} : memref<16x514xf32, #tpu.memory_space<vmem>>, vector<16x1xf32>,
    %c0_10 = arith.constant 0 : index
    %c0_11 = arith.constant 0 : index
    %10 = vector.load %arg4[%c0_10, %c0_11] : memref<16x3xf32, #tpu.memory_space<vmem>>, vector<16x3xf32>
    %c0_12 = arith.constant 0 : index
    %c0_13 = arith.constant 0 : index
    %11 = vector.load %arg5[%c0_12, %c0_13] : memref<16x1xf32, #tpu.memory_space<vmem>>, vector<16x1xf32>
    %12 = vector.extract_strided_slice %10 {offsets = [0, 0], sizes = [16, 1], strides = [1, 1]} : vector<16x3xf32> to vector<16x1xf32>
    %c0_14 = arith.constant 0 : index
    %c0_15 = arith.constant 0 : index
    %13 = vector.load %arg11[%c0_14, %c0_15] : memref<16x514xf32, #tpu.memory_space<vmem>>, vector<16x512xf32>
    %14 = vector.broadcast %12 : vector<16x1xf32> to vector<16x512xf32>
    %15 = arith.mulf %14, %13 : vector<16x512xf32>
    %16 = vector.broadcast %11 : vector<16x1xf32> to vector<16x512xf32>
    %17 = arith.addf %16, %15 : vector<16x512xf32>
    %18 = vector.extract_strided_slice %10 {offsets = [0, 1], sizes = [16, 1], strides = [1, 1]} : vector<16x3xf32> to vector<16x1xf32>
    %c0_16 = arith.constant 0 : index
    %c1_17 = arith.constant 1 : index
    %19 = vector.load %arg11[%c0_16, %c1_17] : memref<16x514xf32, #tpu.memory_space<vmem>>, vector<16x512xf32>
    %20 = vector.broadcast %18 : vector<16x1xf32> to vector<16x512xf32>
    %21 = arith.mulf %20, %19 : vector<16x512xf32>
    %22 = arith.addf %17, %21 : vector<16x512xf32>
    %23 = vector.extract_strided_slice %10 {offsets = [0, 2], sizes = [16, 1], strides = [1, 1]} : vector<16x3xf32> to vector<16x1xf32>
    %c0_18 = arith.constant 0 : index
    %c2 = arith.constant 2 : index
    %24 = vector.load %arg11[%c0_18, %c2] : memref<16x514xf32, #tpu.memory_space<vmem>>, vector<16x512xf32>
    %25 = vector.broadcast %23 : vector<16x1xf32> to vector<16x512xf32>
    %26 = arith.mulf %25, %24 : vector<16x512xf32>
    %27 = arith.addf %22, %26 : vector<16x512xf32>
    %c0_19 = arith.constant 0 : index
    %c0_20 = arith.constant 0 : index
    %28 = vector.load %arg6[%c0_19, %c0_20] : memref<32x16xbf16, #tpu.memory_space<vmem>>, vector<32x16xbf16>
    %29 = arith.truncf %27 : vector<16x512xf32> to vector<16x512xbf16>
    %cst = arith.constant dense<0.000000e+00> : vector<32x512xf32>
    %30 = tpu.matmul %28, %29, %cst {dimension_numbers = #tpu.dot_dimension_numbers<[1], [0], [0], [1], [0, 0, 1, 1], [], []>} : vector<32x16xbf16>, vector<16x512xbf16>, vector<32x512xf32> -> vector<32x512xf32>
    %c0_21 = arith.constant 0 : index
    %c0_22 = arith.constant 0 : index
    %31 = vector.load %arg7[%c0_21, %c0_22] : memref<32x1xf32, #tpu.memory_space<vmem>>, vector<32x1xf32>
    %32 = vector.broadcast %31 : vector<32x1xf32> to vector<32x512xf32>
    %33 = arith.addf %30, %32 : vector<32x512xf32>
    %cst_23 = arith.constant 0.000000e+00 : f32
    %34 = vector.broadcast %cst_23 : f32 to vector<32x512xf32>
    %35 = arith.maximumf %33, %34 : vector<32x512xf32>
    %c0_24 = arith.constant 0 : index
    %c0_25 = arith.constant 0 : index
    %36 = vector.load %arg8[%c0_24, %c0_25] : memref<16x32xbf16, #tpu.memory_space<vmem>>, vector<16x32xbf16>
    %37 = arith.truncf %35 : vector<32x512xf32> to vector<32x512xbf16>
    %cst_26 = arith.constant dense<0.000000e+00> : vector<16x512xf32>
    %38 = tpu.matmul %36, %37, %cst_26 {dimension_numbers = #tpu.dot_dimension_numbers<[1], [0], [0], [1], [0, 0, 1, 1], [], []>} : vector<16x32xbf16>, vector<32x512xbf16>, vector<16x512xf32> -> vector<16x512xf32>
    %c0_27 = arith.constant 0 : index
    %c0_28 = arith.constant 0 : index
    %39 = vector.load %arg9[%c0_27, %c0_28] : memref<16x1xf32, #tpu.memory_space<vmem>>, vector<16x1xf32>
    %40 = vector.broadcast %39 : vector<16x1xf32> to vector<16x512xf32>
    %41 = arith.addf %38, %40 : vector<16x512xf32>
    %42 = arith.addf %41, %2 : vector<16x512xf32>
    %43 = arith.truncf %42 : vector<16x512xf32> to vector<16x512xbf16>
    %c0_29 = arith.constant 0 : index
    %c0_30 = arith.constant 0 : index
    %c0_31 = arith.constant 0 : index
    %44 = vector.load %arg10[%c0_29, %c0_30, %c0_31] : memref<1x16x512xbf16, #tpu.memory_space<vmem>>, vector<1x16x512xbf16>
    %45 = vector.shape_cast %44 : vector<1x16x512xbf16> to vector<16x512xbf16>
    %46 = vector.shape_cast %43 : vector<16x512xbf16> to vector<1x16x512xbf16>
    tpu.vector_store %arg10[%c0_29, %c0_30, %c0_31], %46 {strides = array<i32>} : memref<1x16x512xbf16, #tpu.memory_space<vmem>>, vector<1x16x512xbf16>,
    return
  }
  func.func @transform_0(%arg0: i32, %arg1: i32) -> (i32, i32, i32) {
    %c0_i32 = arith.constant 0 : i32
    %c0_i32_0 = arith.constant 0 : i32
    return %arg0, %c0_i32, %arg1 : i32, i32, i32
  }
  func.func @transform_1(%arg0: i32, %arg1: i32) -> (i32, i32, i32, i32) {
    %c0_i32 = arith.constant 0 : i32
    %c0_i32_0 = arith.constant 0 : i32
    %c0_i32_1 = arith.constant 0 : i32
    return %arg0, %arg1, %c0_i32, %c0_i32_0 : i32, i32, i32, i32
  }
  func.func @transform_2(%arg0: i32, %arg1: i32) -> (i32, i32) {
    %c0_i32 = arith.constant 0 : i32
    %c0_i32_0 = arith.constant 0 : i32
    %c0_i32_1 = arith.constant 0 : i32
    return %c0_i32, %c0_i32_0 : i32, i32
  }
  func.func @transform_3(%arg0: i32, %arg1: i32) -> (i32, i32) {
    %c0_i32 = arith.constant 0 : i32
    %c0_i32_0 = arith.constant 0 : i32
    %c0_i32_1 = arith.constant 0 : i32
    return %c0_i32, %c0_i32_0 : i32, i32
  }
  func.func @transform_4(%arg0: i32, %arg1: i32) -> (i32, i32) {
    %c0_i32 = arith.constant 0 : i32
    %c0_i32_0 = arith.constant 0 : i32
    %c0_i32_1 = arith.constant 0 : i32
    return %c0_i32, %c0_i32_0 : i32, i32
  }
  func.func @transform_5(%arg0: i32, %arg1: i32) -> (i32, i32) {
    %c0_i32 = arith.constant 0 : i32
    %c0_i32_0 = arith.constant 0 : i32
    %c0_i32_1 = arith.constant 0 : i32
    return %c0_i32, %c0_i32_0 : i32, i32
  }
  func.func @transform_6(%arg0: i32, %arg1: i32) -> (i32, i32) {
    %c0_i32 = arith.constant 0 : i32
    %c0_i32_0 = arith.constant 0 : i32
    %c0_i32_1 = arith.constant 0 : i32
    return %c0_i32, %c0_i32_0 : i32, i32
  }
  func.func @transform_7(%arg0: i32, %arg1: i32) -> (i32, i32) {
    %c0_i32 = arith.constant 0 : i32
    %c0_i32_0 = arith.constant 0 : i32
    %c0_i32_1 = arith.constant 0 : i32
    return %c0_i32, %c0_i32_0 : i32, i32
  }
  func.func @transform_8(%arg0: i32, %arg1: i32) -> (i32, i32, i32) {
    %c0_i32 = arith.constant 0 : i32
    %c0_i32_0 = arith.constant 0 : i32
    return %arg0, %c0_i32, %arg1 : i32, i32, i32
  }
}

</mosaic_0001>

<llo_original>
// kernel: tpu_custom_call.1
$region0: #{tpu_custom_call.1}
  #allocation0 [shape = 'u32[]', space=smem, size = 0x4, offset = 0x4, fixed_abs, tag = 'smem constant byte address 0x4 - core index']
  #allocation1 [shape = 'u32[144,128]{1,0:T(1,128)}', space=vmem, size = 0x12000, scoped, tag = 'internal scratch']
  #allocation2 [shape = 'f32[16,514]{1,0:T(8,128)}', space=vmem, size = 0xa000, scoped, tag = 'scratch operand']
  %s0 = inlined_call_operand.vmem [shape: bf16[2,16,1024], index: 0, kind: input, shape index: {}]
  %s1 = inlined_call_operand.vmem [shape: f32[2,2,16,2], index: 1, kind: input, shape index: {}]
  %s2 = inlined_call_operand.vmem [shape: f32[16,3], index: 2, kind: input, shape index: {}]
  %s3 = inlined_call_operand.vmem [shape: f32[16,1], index: 3, kind: input, shape index: {}]
  %s4 = inlined_call_operand.vmem [shape: bf16[32,16], index: 4, kind: input, shape index: {}]
  %s5 = inlined_call_operand.vmem [shape: f32[32,1], index: 5, kind: input, shape index: {}]
  %s6 = inlined_call_operand.vmem [shape: bf16[16,32], index: 6, kind: input, shape index: {}]
  %s7 = inlined_call_operand.vmem [shape: f32[16,1], index: 7, kind: input, shape index: {}]
  %s8 = inlined_call_operand.hbm [shape: bf16[2,16,1024], index: 8, kind: output, shape index: {}]
  %s9 = sld [smem:[#allocation0]]
  $region88: #{tpu_custom_call.1} parent=0
    _
  %s11 = ssub.s32 1, %s9
  %s12 = scalar_select 0, %s11, %s9
  $region1: #{tpu_custom_call.1} parent=0
    #allocation3 [shape = 'u8[32768]{0}', space=vmem, size = 0x8000, scoped, tag = 'input window, operand 0']
    #allocation4 [shape = 'u8[32768]{0}', space=vmem, size = 0x8000, scoped, tag = 'output window, operand 0']
    #allocation5 [shape = 's32[2]{0}', space=sflag, size = 0x8, scoped, tag = 'scoped memory for tpu_custom_call.1']
    %13 = vsyncpa [#allocation5], 0
    %s14 = scalar_lea.sflag [#allocation5], 1
    %15 = vsyncpa %s14, 0
    loop: start=0, step=1, limit=6
    $region2: #{tpu_custom_call.1} parent=1 // loop_pre_header
      _
    $region3: #{tpu_custom_call.1} parent=1 // loop_header
      %s17 = sphi 0, %s21
      %p18 = scmp.ge.s32.totalorder %s17, 6
      %s24 = sphi 0, %s36
      %s25 = sphi 0, %s32
      %s26 = sphi 0, %s24
      %s27 = sphi 0, %s25
      %s28 = sphi 0, %s26
      %s29 = sphi 0, %s27
      %s41 = sphi 0, %s43
      %s44 = sphi 0, %s41
      %s45 = sphi 0, %s44
      %s61 = sphi 0, %s45
      %s69 = sphi 0, %s71
      %s72 = sphi 0, %s69
      %s73 = sphi 0, %s72
      %s89 = sphi 0, %s73
      %s93 = sphi 0, %s93
      %s95 = sphi 0, %s93
      %s96 = sphi 0, %s95
      %s110 = sphi 0, %s96
      %s114 = sphi 0, %s114
      %s116 = sphi 0, %s114
      %s117 = sphi 0, %s116
      %s131 = sphi 0, %s117
      %s135 = sphi 0, %s135
      %s137 = sphi 0, %s135
      %s138 = sphi 0, %s137
      %s152 = sphi 0, %s138
      %s156 = sphi 0, %s156
      %s158 = sphi 0, %s156
      %s159 = sphi 0, %s158
      %s173 = sphi 0, %s159
      %s177 = sphi 0, %s177
      %s179 = sphi 0, %s177
      %s180 = sphi 0, %s179
      %s194 = sphi 0, %s180
      %s198 = sphi 0, %s198
      %s200 = sphi 0, %s198
      %s201 = sphi 0, %s200
      %s215 = sphi 0, %s201
      %s223 = sphi 0, %s225
      %s226 = sphi 0, %s223
      %s227 = sphi 0, %s226
      %s243 = sphi 0, %s227
    $region4: #{tpu_custom_call.1} parent=1 // loop_header_branch
      %20 = sbr.rel (%p18) target = $region8
    $region5: #{tpu_custom_call.1} parent=1 // loop_body
      %s22 = ssub.s32 %s17, 1
      %s23 = ssub.s32 %s17, 2
      %s30 = sadd.s32 1, %s25
      %p31 = scmp.ge.s32.totalorder %s30, 2
      %s32 = scalar_select %p31, 0, %s30
      %s33 = sadd.s32 1, %s24
      %s34 = scalar_select %p31, %s33, %s24
      %p35 = scmp.ge.s32.totalorder %s34, 2
      %s36 = scalar_select %p35, 0, %s34
      %s37 = ssub.s32 %s24, %s36
      %s38 = ssub.s32 %s25, %s32
      %s39 = sor.u32 %s37, %s38
      %p40 = scmp.eq.s32.totalorder %s39, 0
      %s42 = sadd.s32 %s41, 1
      %s43 = scalar_select %p40, %s41, %s42
      %p46 = pneg %p40
      %p47 = scmp.eq.s32.totalorder %s17, 3
      %p48 = por %p46, %p47
      %p49 = scmp.ne.s32.totalorder %s41, %s44
      %p50 = scmp.eq.s32.totalorder %s17, 0
      %p51 = por %p49, %p50
      %p52 = scmp.ne.s32.totalorder %s41, %s44
      %p53 = scmp.eq.s32.totalorder %s22, 3
      %p54 = por %p52, %p53
      %p55 = scmp.ne.s32.totalorder %s44, %s45
      %p56 = scmp.eq.s32.totalorder %s22, 0
      %p57 = por %p55, %p56
      %p58 = scmp.ne.s32.totalorder %s44, %s45
      %p59 = scmp.eq.s32.totalorder %s23, 3
      %p60 = por %p58, %p59
      %p62 = scmp.ne.s32.totalorder %s45, %s61
      %p63 = scmp.eq.s32.totalorder %s23, 0
      %p64 = por %p62, %p63
      %s65 = ssub.s32 %s24, %s36
      %s66 = ssub.s32 %s25, %s32
      %s67 = sor.u32 %s65, %s66
      %p68 = scmp.eq.s32.totalorder %s67, 0
      %s70 = sadd.s32 %s69, 1
      %s71 = scalar_select %p68, %s69, %s70
      %p74 = pneg %p68
      %p75 = scmp.eq.s32.totalorder %s17, 3
      %p76 = por %p74, %p75
      %p77 = scmp.ne.s32.totalorder %s69, %s72
      %p78 = scmp.eq.s32.totalorder %s17, 0
      %p79 = por %p77, %p78
      %p80 = scmp.ne.s32.totalorder %s69, %s72
      %p81 = scmp.eq.s32.totalorder %s22, 3
      %p82 = por %p80, %p81
      %p83 = scmp.ne.s32.totalorder %s72, %s73
      %p84 = scmp.eq.s32.totalorder %s22, 0
      %p85 = por %p83, %p84
      %p86 = scmp.ne.s32.totalorder %s72, %s73
      %p87 = scmp.eq.s32.totalorder %s23, 3
      %p88 = por %p86, %p87
      %p90 = scmp.ne.s32.totalorder %s73, %s89
      %p91 = scmp.eq.s32.totalorder %s23, 0
      %p92 = por %p90, %p91
      %s94 = sadd.s32 %s93, 1
      %p97 = scmp.eq.s32.totalorder %s17, 3
      %p98 = scmp.ne.s32.totalorder %s93, %s95
      %p99 = scmp.eq.s32.totalorder %s17, 0
      %p100 = por %p98, %p99
      %p101 = scmp.ne.s32.totalorder %s93, %s95
      %p102 = scmp.eq.s32.totalorder %s22, 3
      %p103 = por %p101, %p102
      %p104 = scmp.ne.s32.totalorder %s95, %s96
      %p105 = scmp.eq.s32.totalorder %s22, 0
      %p106 = por %p104, %p105
      %p107 = scmp.ne.s32.totalorder %s95, %s96
      %p108 = scmp.eq.s32.totalorder %s23, 3
      %p109 = por %p107, %p108
      %p111 = scmp.ne.s32.totalorder %s96, %s110
      %p112 = scmp.eq.s32.totalorder %s23, 0
      %p113 = por %p111, %p112
      %s115 = sadd.s32 %s114, 1
      %p118 = scmp.eq.s32.totalorder %s17, 3
      %p119 = scmp.ne.s32.totalorder %s114, %s116
      %p120 = scmp.eq.s32.totalorder %s17, 0
      %p121 = por %p119, %p120
      %p122 = scmp.ne.s32.totalorder %s114, %s116
      %p123 = scmp.eq.s32.totalorder %s22, 3
      %p124 = por %p122, %p123
      %p125 = scmp.ne.s32.totalorder %s116, %s117
      %p126 = scmp.eq.s32.totalorder %s22, 0
      %p127 = por %p125, %p126
      %p128 = scmp.ne.s32.totalorder %s116, %s117
      %p129 = scmp.eq.s32.totalorder %s23, 3
      %p130 = por %p128, %p129
      %p132 = scmp.ne.s32.totalorder %s117, %s131
      %p133 = scmp.eq.s32.totalorder %s23, 0
      %p134 = por %p132, %p133
      %s136 = sadd.s32 %s135, 1
      %p139 = scmp.eq.s32.totalorder %s17, 3
      %p140 = scmp.ne.s32.totalorder %s135, %s137
      %p141 = scmp.eq.s32.totalorder %s17, 0
      %p142 = por %p140, %p141
      %p143 = scmp.ne.s32.totalorder %s135, %s137
      %p144 = scmp.eq.s32.totalorder %s22, 3
      %p145 = por %p143, %p144
      %p146 = scmp.ne.s32.totalorder %s137, %s138
      %p147 = scmp.eq.s32.totalorder %s22, 0
      %p148 = por %p146, %p147
      %p149 = scmp.ne.s32.totalorder %s137, %s138
      %p150 = scmp.eq.s32.totalorder %s23, 3
      %p151 = por %p149, %p150
      %p153 = scmp.ne.s32.totalorder %s138, %s152
      %p154 = scmp.eq.s32.totalorder %s23, 0
      %p155 = por %p153, %p154
      %s157 = sadd.s32 %s156, 1
      %p160 = scmp.eq.s32.totalorder %s17, 3
      %p161 = scmp.ne.s32.totalorder %s156, %s158
      %p162 = scmp.eq.s32.totalorder %s17, 0
      %p163 = por %p161, %p162
      %p164 = scmp.ne.s32.totalorder %s156, %s158
      %p165 = scmp.eq.s32.totalorder %s22, 3
      %p166 = por %p164, %p165
      %p167 = scmp.ne.s32.totalorder %s158, %s159
      %p168 = scmp.eq.s32.totalorder %s22, 0
      %p169 = por %p167, %p168
      %p170 = scmp.ne.s32.totalorder %s158, %s159
      %p171 = scmp.eq.s32.totalorder %s23, 3
      %p172 = por %p170, %p171
      %p174 = scmp.ne.s32.totalorder %s159, %s173
      %p175 = scmp.eq.s32.totalorder %s23, 0
      %p176 = por %p174, %p175
      %s178 = sadd.s32 %s177, 1
      %p181 = scmp.eq.s32.totalorder %s17, 3
      %p182 = scmp.ne.s32.totalorder %s177, %s179
      %p183 = scmp.eq.s32.totalorder %s17, 0
      %p184 = por %p182, %p183
      %p185 = scmp.ne.s32.totalorder %s177, %s179
      %p186 = scmp.eq.s32.totalorder %s22, 3
      %p187 = por %p185, %p186
      %p188 = scmp.ne.s32.totalorder %s179, %s180
      %p189 = scmp.eq.s32.totalorder %s22, 0
      %p190 = por %p188, %p189
      %p191 = scmp.ne.s32.totalorder %s179, %s180
      %p192 = scmp.eq.s32.totalorder %s23, 3
      %p193 = por %p191, %p192
      %p195 = scmp.ne.s32.totalorder %s180, %s194
      %p196 = scmp.eq.s32.totalorder %s23, 0
      %p197 = por %p195, %p196
      %s199 = sadd.s32 %s198, 1
      %p202 = scmp.eq.s32.totalorder %s17, 3
      %p203 = scmp.ne.s32.totalorder %s198, %s200
      %p204 = scmp.eq.s32.totalorder %s17, 0
      %p205 = por %p203, %p204
      %p206 = scmp.ne.s32.totalorder %s198, %s200
      %p207 = scmp.eq.s32.totalorder %s22, 3
      %p208 = por %p206, %p207
      %p209 = scmp.ne.s32.totalorder %s200, %s201
      %p210 = scmp.eq.s32.totalorder %s22, 0
      %p211 = por %p209, %p210
      %p212 = scmp.ne.s32.totalorder %s200, %s201
      %p213 = scmp.eq.s32.totalorder %s23, 3
      %p214 = por %p212, %p213
      %p216 = scmp.ne.s32.totalorder %s201, %s215
      %p217 = scmp.eq.s32.totalorder %s23, 0
      %p218 = por %p216, %p217
      %s219 = ssub.s32 %s24, %s36
      %s220 = ssub.s32 %s25, %s32
      %s221 = sor.u32 %s219, %s220
      %p222 = scmp.eq.s32.totalorder %s221, 0
      %s224 = sadd.s32 %s223, 1
      %s225 = scalar_select %p222, %s223, %s224
      %p228 = pneg %p222
      %p229 = scmp.eq.s32.totalorder %s17, 3
      %p230 = por %p228, %p229
      %p231 = scmp.ne.s32.totalorder %s223, %s226
      %p232 = scmp.eq.s32.totalorder %s17, 0
      %p233 = por %p231, %p232
      %p234 = scmp.ne.s32.totalorder %s223, %s226
      %p235 = scmp.eq.s32.totalorder %s22, 3
      %p236 = por %p234, %p235
      %p237 = scmp.ne.s32.totalorder %s226, %s227
      %p238 = scmp.eq.s32.totalorder %s22, 0
      %p239 = por %p237, %p238
      %p240 = scmp.ne.s32.totalorder %s226, %s227
      %p241 = scmp.eq.s32.totalorder %s23, 3
      %p242 = por %p240, %p241
      %p244 = scmp.ne.s32.totalorder %s227, %s243
      %p245 = scmp.eq.s32.totalorder %s23, 0
      %p246 = por %p244, %p245
      %p247 = scmp.le.s32.totalorder 1, %s17
      %p248 = scmp.lt.s32.totalorder %s17, 5
      %p249 = pnand %p247, %p248
      %p250 = pneg %p249
      // Predicated region
      $region9: #{tpu_custom_call.1} parent=5 // pred_check
        _
      $region10: #{tpu_custom_call.1} parent=5 // pred_check_branch
        %252 = sbr.rel (%p249) target = $region12
      $region11: #{tpu_custom_call.1} parent=5 // pred_region
        %s253 = ssub.s32 %s17, 1
        // Predicated region
        $region13: #{tpu_custom_call.1} parent=11 // pred_check
          %p254 = pneg %p106
        $region14: #{tpu_custom_call.1} parent=11 // pred_check_branch
          %256 = sbr.rel (%p254) target = $region16
        $region15: #{tpu_custom_call.1} parent=11 // pred_region
          _
        $region16: #{tpu_custom_call.1} parent=11 // pred_fallthru
          _
        // Predicated region
        $region17: #{tpu_custom_call.1} parent=11 // pred_check
          %p257 = pneg %p127
        $region18: #{tpu_custom_call.1} parent=11 // pred_check_branch
          %259 = sbr.rel (%p257) target = $region20
        $region19: #{tpu_custom_call.1} parent=11 // pred_region
          _
        $region20: #{tpu_custom_call.1} parent=11 // pred_fallthru
          _
        // Predicated region
        $region21: #{tpu_custom_call.1} parent=11 // pred_check
          %p260 = pneg %p148
        $region22: #{tpu_custom_call.1} parent=11 // pred_check_branch
          %262 = sbr.rel (%p260) target = $region24
        $region23: #{tpu_custom_call.1} parent=11 // pred_region
          _
        $region24: #{tpu_custom_call.1} parent=11 // pred_fallthru
          _
        // Predicated region
        $region25: #{tpu_custom_call.1} parent=11 // pred_check
          %p263 = pneg %p169
        $region26: #{tpu_custom_call.1} parent=11 // pred_check_branch
          %265 = sbr.rel (%p263) target = $region28
        $region27: #{tpu_custom_call.1} parent=11 // pred_region
          _
        $region28: #{tpu_custom_call.1} parent=11 // pred_fallthru
          _
        // Predicated region
        $region29: #{tpu_custom_call.1} parent=11 // pred_check
          %p266 = pneg %p190
        $region30: #{tpu_custom_call.1} parent=11 // pred_check_branch
          %268 = sbr.rel (%p266) target = $region32
        $region31: #{tpu_custom_call.1} parent=11 // pred_region
          _
        $region32: #{tpu_custom_call.1} parent=11 // pred_fallthru
          _
        // Predicated region
        $region33: #{tpu_custom_call.1} parent=11 // pred_check
          %p269 = pneg %p211
        $region34: #{tpu_custom_call.1} parent=11 // pred_check_branch
          %271 = sbr.rel (%p269) target = $region36
        $region35: #{tpu_custom_call.1} parent=11 // pred_region
          _
        $region36: #{tpu_custom_call.1} parent=11 // pred_fallthru
          _
      $region12: #{tpu_custom_call.1} parent=5 // pred_fallthru
        _
      %p272 = scmp.lt.s32.totalorder %s17, 4
      // Predicated region
      $region37: #{tpu_custom_call.1} parent=5 // pred_check
        %p273 = pneg %p272
      $region38: #{tpu_custom_call.1} parent=5 // pred_check_branch
        %275 = sbr.rel (%p273) target = $region40
      $region39: #{tpu_custom_call.1} parent=5 // pred_region
        // Predicated region
        $region41: #{tpu_custom_call.1} parent=39 // pred_check
          %p276 = pneg %p51
        $region42: #{tpu_custom_call.1} parent=39 // pred_check_branch
          %278 = sbr.rel (%p276) target = $region44
        $region43: #{tpu_custom_call.1} parent=39 // pred_region
          %s279 = sand.u32 %s41, 1
          %s280 = sand.u32 %s41, 1
          %s281 = smul.addr %s280, 32
          %s282 = scalar_lea.vmem [#allocation3], %s281
          %s283 = smul.u32 4, %s25
          %s284 = smul.addr %s24, 16
          %s285 = sadd.s32 %s283, %s284
          %s286 = smul.addr %s285, 4
          %s287 = scalar_lea.vmem %s0, %s286
          // Predicated region
          $region45: #{tpu_custom_call.1} parent=43 // pred_check
            _
          $region46: #{tpu_custom_call.1} parent=43 // pred_check_branch
            %289 = sbr.rel (0) target = $region48
          $region47: #{tpu_custom_call.1} parent=43 // pred_region
            // Predicated region
            $region49: #{tpu_custom_call.1} parent=47 // pred_check
              _
            $region50: #{tpu_custom_call.1} parent=47 // pred_check_branch
              %291 = sbr.rel (0) target = $region52
            $region51: #{tpu_custom_call.1} parent=47 // pred_region
              loop: start=0, step=1, limit=1
              $region53: #{tpu_custom_call.1} parent=51 // loop_pre_header
                _
              $region54: #{tpu_custom_call.1} parent=51 // loop_header
                %s293 = sphi 0, %s297
                %p294 = scmp.ge.s32.totalorder %s293, 1
                %s298 = sphi %s287, %s287
                %s299 = sphi %s282, %s282
              $region55: #{tpu_custom_call.1} parent=51 // loop_header_branch
                %296 = sbr.rel (%p294) target = $region59
              $region56: #{tpu_custom_call.1} parent=51 // loop_body
                %v300 = vld [vmem:[%s298] sm:$0xff]
                %301 = vst [vmem:[%s299] sm:$0xff] %v300
                %v302 = vld [vmem:[%s298 + $0x8] sm:$0xff]
                %303 = vst [vmem:[%s299 + $0x8] sm:$0xff] %v302
                %v304 = vld [vmem:[%s298 + $0x20] sm:$0xff]
                %305 = vst [vmem:[%s299 + $0x10] sm:$0xff] %v304
                %v306 = vld [vmem:[%s298 + $0x28] sm:$0xff]
                %307 = vst [vmem:[%s299 + $0x18] sm:$0xff] %v306
              $region57: #{tpu_custom_call.1} parent=51 // loop_footer
                %s297 = sadd.s32 1, %s293
              $region58: #{tpu_custom_call.1} parent=51 // loop_footer_branch
                %292 = sbr.rel target = $region54
              $region59: #{tpu_custom_call.1} parent=51 // loop_exit
                _
            $region52: #{tpu_custom_call.1} parent=47 // pred_fallthru
              _
            // Predicated region
            $region60: #{tpu_custom_call.1} parent=47 // pred_check
              _
            $region61: #{tpu_custom_call.1} parent=47 // pred_check_branch
              %309 = sbr.rel target = $region63
            $region62: #{tpu_custom_call.1} parent=47 // pred_region
              _
            $region63: #{tpu_custom_call.1} parent=47 // pred_fallthru
              _
          $region48: #{tpu_custom_call.1} parent=43 // pred_fallthru
            _
          %310 = vnop
        $region44: #{tpu_custom_call.1} parent=39 // pred_fallthru
          _
        // Predicated region
        $region64: #{tpu_custom_call.1} parent=39 // pred_check
          %p311 = pneg %p79
        $region65: #{tpu_custom_call.1} parent=39 // pred_check_branch
          %313 = sbr.rel (%p311) target = $region67
        $region66: #{tpu_custom_call.1} parent=39 // pred_region
          %p314 = scmp.lt.s32.totalorder %s24, 1
          %s315 = scalar_select %p314, %s24, 1
          %p316 = scmp.lt.s32.totalorder %s25, 1
          %s317 = scalar_select %p316, %s25, 1
          %s318 = smul.addr %s317, 2
          %s319 = smul.addr %s315, 4
          %s320 = sadd.s32 %s318, %s319
          %s321 = smul.addr %s320, 8
          %s322 = scalar_lea.vmem %s1, %s321
        $region67: #{tpu_custom_call.1} parent=39 // pred_fallthru
          _
      $region40: #{tpu_custom_call.1} parent=5 // pred_fallthru
        _
      %p323 = scmp.le.s32.totalorder 1, %s17
      %p324 = scmp.lt.s32.totalorder %s17, 5
      %p325 = pnand %p323, %p324
      %p326 = pneg %p325
      // Predicated region
      $region68: #{tpu_custom_call.1} parent=5 // pred_check
        _
      $region69: #{tpu_custom_call.1} parent=5 // pred_check_branch
        %328 = sbr.rel (%p325) target = $region71
      $region70: #{tpu_custom_call.1} parent=5 // pred_region
        %s329 = ssub.s32 %s17, 1
        %s330 = sand.u32 %s44, 1
        %s331 = sand.u32 %s44, 1
        %s332 = smul.addr %s331, 32
        %s333 = scalar_lea.vmem [#allocation3], %s332
        // Predicated region
        $region72: #{tpu_custom_call.1} parent=70 // pred_check
          %p334 = pneg %p57
        $region73: #{tpu_custom_call.1} parent=70 // pred_check_branch
          %336 = sbr.rel (%p334) target = $region75
        $region74: #{tpu_custom_call.1} parent=70 // pred_region
          _
        $region75: #{tpu_custom_call.1} parent=70 // pred_fallthru
          _
        %s337 = sand.u32 %s44, 1
        %s338 = sand.u32 %s44, 1
        %s339 = smul.addr %s338, 32
        %s340 = scalar_lea.vmem [#allocation3], %s339
        %p341 = pneg %p57
        %p342 = pneg %p54
        %p343 = scmp.lt.s32.totalorder %s26, 1
        %s344 = scalar_select %p343, %s26, 1
        %p345 = scmp.lt.s32.totalorder %s27, 1
        %s346 = scalar_select %p345, %s27, 1
        %s347 = smul.addr %s346, 2
        %s348 = smul.addr %s344, 4
        %s349 = sadd.s32 %s347, %s348
        %s350 = smul.addr %s349, 8
        %s351 = scalar_lea.vmem %s1, %s350
        %p352 = pneg %p85
        %p353 = pneg %p82
        %p354 = pneg %p106
        %p355 = pneg %p103
        %p356 = pneg %p127
        %p357 = pneg %p124
        %p358 = pneg %p148
        %p359 = pneg %p145
        %p360 = pneg %p169
        %p361 = pneg %p166
        %p362 = pneg %p190
        %p363 = pneg %p187
        %p364 = pneg %p211
        %p365 = pneg %p208
        %p366 = pneg %p239
        %p367 = pneg %p236
        %s368 = sand.u32 %s226, 1
        %s369 = scalar_lea.sflag [#allocation5], %s368
        %s370 = sand.u32 %s226, 1
        %s371 = smul.addr %s370, 32
        %s372 = scalar_lea.vmem [#allocation4], %s371
        %s373 = smul.u32 4, %s27
        %p374 = scmp.lt.s32.totalorder %s26, 1
        %s375 = scalar_select %p374, %s26, 1
        %p376 = scmp.lt.s32.totalorder %s27, 1
        %s377 = scalar_select %p376, %s27, 1
        %s378 = smul.addr %s377, 2
        %s379 = smul.addr %s375, 4
        %s380 = sadd.s32 %s378, %s379
        %s381 = smul.addr %s380, 8
        %s382 = scalar_lea.vmem %s1, %s381
        %s383 = smul.u32 4, %s27
        %v385 = vld [vmem:[%s333] sm:$0xff]
        %v386 = vld [vmem:[%s333 + $0x8] sm:$0xff]
        %v387 = vld [vmem:[%s333 + $0x10] sm:$0xff]
        %v388 = vld [vmem:[%s333 + $0x18] sm:$0xff]
        %v389 = vunpack.c.l.bf16 %v385
        %v390 = vunpack.c.h.bf16 %v385
        %v391 = vunpack.c.l.bf16 %v386
        %v392 = vunpack.c.h.bf16 %v386
        %v393 = vunpack.c.l.bf16 %v387
        %v394 = vunpack.c.h.bf16 %v387
        %v395 = vunpack.c.l.bf16 %v388
        %v396 = vunpack.c.h.bf16 %v388
        %v397 = vld [vmem:[%s382] sm:$0xff]
        %v398 = vld [vmem:[%s382 + $0x8] sm:$0xff]
        %407 = vrot.lane.b32.xlu0 %v389, 1
        %v408 = vpop.permute.xlu0 %407
        %409 = vrot.lane.b32.xlu0 %v390, 1
        %v410 = vpop.permute.xlu0 %409
        %411 = vrot.lane.b32.xlu0 %v391, 1
        %v412 = vpop.permute.xlu0 %411
        %413 = vrot.lane.b32.xlu0 %v392, 1
        %v414 = vpop.permute.xlu0 %413
        %415 = vrot.lane.b32.xlu0 %v393, 1
        %v416 = vpop.permute.xlu0 %415
        %417 = vrot.lane.b32.xlu0 %v394, 1
        %v418 = vpop.permute.xlu0 %417
        %419 = vrot.lane.b32.xlu0 %v395, 1
        %v420 = vpop.permute.xlu0 %419
        %421 = vrot.lane.b32.xlu0 %v396, 1
        %v422 = vpop.permute.xlu0 %421
        %vm423 = vcmask 7168
        %v424 = vsel %vm423, %v408, %v410
        %v425 = vsel %vm423, %v410, %v412
        %v426 = vsel %vm423, %v412, %v414
        %v427 = vsel %vm423, %v416, %v418
        %v428 = vsel %vm423, %v418, %v420
        %v429 = vsel %vm423, %v420, %v422
        %vm440 = vcmask 1047560
        %441 = vst.msk [vmem:[#allocation2] sm:$0xff] %vm440, %v408
        %442 = vst [vmem:[#allocation2 + $0x8] sm:$0xff] %v424
        %443 = vst [vmem:[#allocation2 + $0x10] sm:$0xff] %v425
        %444 = vst [vmem:[#allocation2 + $0x18] sm:$0xff] %v426
        %445 = vst.msk [vmem:[#allocation2 + $0x20] sm:$0xff] %vm423, %v414
        %446 = vst.msk [vmem:[#allocation2 + $0x28] sm:$0xff] %vm440, %v416
        %447 = vst [vmem:[#allocation2 + $0x30] sm:$0xff] %v427
        %448 = vst [vmem:[#allocation2 + $0x38] sm:$0xff] %v428
        %449 = vst [vmem:[#allocation2 + $0x40] sm:$0xff] %v429
        %450 = vst.msk [vmem:[#allocation2 + $0x48] sm:$0xff] %vm423, %v422
        %451 = vst.msk [vmem:[#allocation2] sm:$0xff] %vm423, %v397
        %452 = vst.msk [vmem:[#allocation2 + $0x28] sm:$0xff] %vm423, %v398
        %vm453 = vcmask 15368
        %454 = vst.msk [vmem:[#allocation2 + $0x20] sm:$0xff] %vm453, %v397
        %455 = vst.msk [vmem:[#allocation2 + $0x48] sm:$0xff] %vm453, %v398
        %v456 = vld [vmem:[%s2] sm:$0xff]
        %v457 = vld [vmem:[%s2 + $0x8] sm:$0xff]
        %v458 = vld [vmem:[%s3] sm:$0xff]
        %v459 = vld [vmem:[%s3 + $0x8] sm:$0xff]
        %v460 = vld [vmem:[#allocation2] sm:$0xff]
        %v461 = vld [vmem:[#allocation2 + $0x8] sm:$0xff]
        %v462 = vld [vmem:[#allocation2 + $0x10] sm:$0xff]
        %v463 = vld [vmem:[#allocation2 + $0x18] sm:$0xff]
        %v464 = vld [vmem:[#allocation2 + $0x28] sm:$0xff]
        %v465 = vld [vmem:[#allocation2 + $0x30] sm:$0xff]
        %v466 = vld [vmem:[#allocation2 + $0x38] sm:$0xff]
        %v467 = vld [vmem:[#allocation2 + $0x40] sm:$0xff]
        %469 = vset.pattern.permute.xlu0 0
        %470 = vperm.xlu0 %469, %v456
        %v471 = vpop.permute.xlu0 %470
        %474 = vset.pattern.permute.xlu0 0
        %475 = vperm.xlu0 %474, %v457
        %v476 = vpop.permute.xlu0 %475
        %v478 = vmul.f32 %v471, %v460
        %v479 = vmul.f32 %v471, %v461
        %v480 = vmul.f32 %v471, %v462
        %v481 = vmul.f32 %v471, %v463
        %v482 = vmul.f32 %v476, %v464
        %v483 = vmul.f32 %v476, %v465
        %v484 = vmul.f32 %v476, %v466
        %v485 = vmul.f32 %v476, %v467
        %487 = vset.pattern.permute.xlu0 0
        %488 = vperm.xlu0 %487, %v458
        %v489 = vpop.permute.xlu0 %488
        %492 = vset.pattern.permute.xlu0 0
        %493 = vperm.xlu0 %492, %v459
        %v494 = vpop.permute.xlu0 %493
        %v496 = vadd.f32 %v489, %v478
        %v497 = vadd.f32 %v489, %v479
        %v498 = vadd.f32 %v489, %v480
        %v499 = vadd.f32 %v489, %v481
        %v500 = vadd.f32 %v494, %v482
        %v501 = vadd.f32 %v494, %v483
        %v502 = vadd.f32 %v494, %v484
        %v503 = vadd.f32 %v494, %v485
        %v504 = vld [vmem:[#allocation2] sm:$0xff]
        %v505 = vld [vmem:[#allocation2 + $0x8] sm:$0xff]
        %v506 = vld [vmem:[#allocation2 + $0x10] sm:$0xff]
        %v507 = vld [vmem:[#allocation2 + $0x18] sm:$0xff]
        %v508 = vld [vmem:[#allocation2 + $0x20] sm:$0xff]
        %v509 = vld [vmem:[#allocation2 + $0x28] sm:$0xff]
        %v510 = vld [vmem:[#allocation2 + $0x30] sm:$0xff]
        %v511 = vld [vmem:[#allocation2 + $0x38] sm:$0xff]
        %v512 = vld [vmem:[#allocation2 + $0x40] sm:$0xff]
        %v513 = vld [vmem:[#allocation2 + $0x48] sm:$0xff]
        %514 = vset.pattern.permute.xlu0 1
        %515 = vperm.xlu0 %514, %v456
        %v516 = vpop.permute.xlu0 %515
        %518 = vset.pattern.permute.xlu0 1
        %519 = vperm.xlu0 %518, %v457
        %v520 = vpop.permute.xlu0 %519
        %v522 = vmul.f32 %v516, %v504
        %v523 = vmul.f32 %v516, %v505
        %v524 = vmul.f32 %v516, %v506
        %v525 = vmul.f32 %v516, %v507
        %v526 = vmul.f32 %v516, %v508
        %v527 = vmul.f32 %v520, %v509
        %v528 = vmul.f32 %v520, %v510
        %v529 = vmul.f32 %v520, %v511
        %v530 = vmul.f32 %v520, %v512
        %v531 = vmul.f32 %v520, %v513
        %542 = vrot.lane.b32.xlu0 %v522, 127
        %v543 = vpop.permute.xlu0 %542
        %544 = vrot.lane.b32.xlu0 %v523, 127
        %v545 = vpop.permute.xlu0 %544
        %546 = vrot.lane.b32.xlu0 %v524, 127
        %v547 = vpop.permute.xlu0 %546
        %548 = vrot.lane.b32.xlu0 %v525, 127
        %v549 = vpop.permute.xlu0 %548
        %550 = vrot.lane.b32.xlu0 %v526, 127
        %v551 = vpop.permute.xlu0 %550
        %552 = vrot.lane.b32.xlu0 %v527, 127
        %v553 = vpop.permute.xlu0 %552
        %554 = vrot.lane.b32.xlu0 %v528, 127
        %v555 = vpop.permute.xlu0 %554
        %556 = vrot.lane.b32.xlu0 %v529, 127
        %v557 = vpop.permute.xlu0 %556
        %558 = vrot.lane.b32.xlu0 %v530, 127
        %v559 = vpop.permute.xlu0 %558
        %560 = vrot.lane.b32.xlu0 %v531, 127
        %v561 = vpop.permute.xlu0 %560
        %vm562 = vcmask 1039360
        %v563 = vsel %vm562, %v543, %v545
        %v564 = vsel %vm562, %v545, %v547
        %v565 = vsel %vm562, %v547, %v549
        %v566 = vsel %vm562, %v549, %v551
        %v567 = vsel %vm562, %v553, %v555
        %v568 = vsel %vm562, %v555, %v557
        %v569 = vsel %vm562, %v557, %v559
        %v570 = vsel %vm562, %v559, %v561
        %v579 = vadd.f32 %v496, %v563
        %v580 = vadd.f32 %v497, %v564
        %v581 = vadd.f32 %v498, %v565
        %v582 = vadd.f32 %v499, %v566
        %v583 = vadd.f32 %v500, %v567
        %v584 = vadd.f32 %v501, %v568
        %v585 = vadd.f32 %v502, %v569
        %v586 = vadd.f32 %v503, %v570
        %587 = vset.pattern.permute.xlu0 2
        %588 = vperm.xlu0 %587, %v456
        %v589 = vpop.permute.xlu0 %588
        %591 = vset.pattern.permute.xlu0 2
        %592 = vperm.xlu0 %591, %v457
        %v593 = vpop.permute.xlu0 %592
        %v595 = vmul.f32 %v589, %v504
        %v596 = vmul.f32 %v589, %v505
        %v597 = vmul.f32 %v589, %v506
        %v598 = vmul.f32 %v589, %v507
        %v599 = vmul.f32 %v589, %v508
        %v600 = vmul.f32 %v593, %v509
        %v601 = vmul.f32 %v593, %v510
        %v602 = vmul.f32 %v593, %v511
        %v603 = vmul.f32 %v593, %v512
        %v604 = vmul.f32 %v593, %v513
        %615 = vrot.lane.b32.xlu0 %v595, 126
        %v616 = vpop.permute.xlu0 %615
        %617 = vrot.lane.b32.xlu0 %v596, 126
        %v618 = vpop.permute.xlu0 %617
        %619 = vrot.lane.b32.xlu0 %v597, 126
        %v620 = vpop.permute.xlu0 %619
        %621 = vrot.lane.b32.xlu0 %v598, 126
        %v622 = vpop.permute.xlu0 %621
        %623 = vrot.lane.b32.xlu0 %v599, 126
        %v624 = vpop.permute.xlu0 %623
        %625 = vrot.lane.b32.xlu0 %v600, 126
        %v626 = vpop.permute.xlu0 %625
        %627 = vrot.lane.b32.xlu0 %v601, 126
        %v628 = vpop.permute.xlu0 %627
        %629 = vrot.lane.b32.xlu0 %v602, 126
        %v630 = vpop.permute.xlu0 %629
        %631 = vrot.lane.b32.xlu0 %v603, 126
        %v632 = vpop.permute.xlu0 %631
        %633 = vrot.lane.b32.xlu0 %v604, 126
        %v634 = vpop.permute.xlu0 %633
        %vm635 = vcmask 1031168
        %v636 = vsel %vm635, %v616, %v618
        %v637 = vsel %vm635, %v618, %v620
        %v638 = vsel %vm635, %v620, %v622
        %v639 = vsel %vm635, %v622, %v624
        %v640 = vsel %vm635, %v626, %v628
        %v641 = vsel %vm635, %v628, %v630
        %v642 = vsel %vm635, %v630, %v632
        %v643 = vsel %vm635, %v632, %v634
        %v652 = vadd.f32 %v579, %v636
        %v653 = vadd.f32 %v580, %v637
        %v654 = vadd.f32 %v581, %v638
        %v655 = vadd.f32 %v582, %v639
        %v656 = vadd.f32 %v583, %v640
        %v657 = vadd.f32 %v584, %v641
        %v658 = vadd.f32 %v585, %v642
        %v659 = vadd.f32 %v586, %v643
        %v660 = vld [vmem:[%s4] sm:$0xf]
        %v661 = vld [vmem:[%s4 + $0x4] sm:$0xf]
        %v662 = vld [vmem:[%s4 + $0x8] sm:$0xf]
        %v663 = vld [vmem:[%s4 + $0xc] sm:$0xf]
        %v664 = vpack.c.bf16 %v656, %v652
        %v665 = vpack.c.bf16 %v657, %v653
        %v666 = vpack.c.bf16 %v658, %v654
        %v667 = vpack.c.bf16 %v659, %v655
        %v668 = vld [vmem:[%s5] sm:$0xff]
        %v669 = vld [vmem:[%s5 + $0x8] sm:$0xff]
        %v670 = vld [vmem:[%s5 + $0x10] sm:$0xff]
        %v671 = vld [vmem:[%s5 + $0x18] sm:$0xff]
        %673 = vset.pattern.permute.xlu0 0
        %674 = vperm.xlu0 %673, %v668
        %v675 = vpop.permute.xlu0 %674
        %678 = vset.pattern.permute.xlu0 0
        %679 = vperm.xlu0 %678, %v669
        %v680 = vpop.permute.xlu0 %679
        %683 = vset.pattern.permute.xlu0 0
        %684 = vperm.xlu0 %683, %v670
        %v685 = vpop.permute.xlu0 %684
        %688 = vset.pattern.permute.xlu0 0
        %689 = vperm.xlu0 %688, %v671
        %v690 = vpop.permute.xlu0 %689
        %v696 = vunpack.c.l.b16 %v660
        %v697 = vunpack.c.l.b16 %v661
        %v698 = vunpack.c.l.b16 %v662
        %v699 = vunpack.c.l.b16 %v663
        %v700 = vpack.c.b16 %v697, %v696
        %v701 = vpack.c.b16 %v699, %v698
        %vm702 = vcmask 130048
        %v704 = vsel %vm702, %v700, 0
        %v707 = vsel %vm702, %v701, 0
        %709 = vmatprep.subr.bf16.mxu0 %v665
        %710 = vmatpush1.bf16.msra.mxu0 %v664
        %711 = vmatprep.subr.bf16.mxu0 0
        %712 = vmatpush1.bf16.msra.mxu0 0
        %713 = vmatprep.subr.bf16.mxu0 0
        %714 = vmatpush1.bf16.msra.mxu0 0
        %715 = vmatprep.subr.bf16.mxu0 0
        %716 = vmatpush1.bf16.msra.mxu0 0
        %717 = vmatprep.subr.bf16.mxu0 0
        %718 = vmatpush1.bf16.msra.mxu0 0
        %719 = vmatprep.subr.bf16.mxu0 0
        %720 = vmatpush1.bf16.msra.mxu0 0
        %721 = vmatprep.subr.bf16.mxu0 0
        %722 = vmatpush1.bf16.msra.mxu0 0
        %723 = vmatprep.subr.bf16.mxu0 0
        %724 = vmatpush1.bf16.msra.mxu0 0
        %725 = vmatprep.subr.bf16.mxu0 0
        %726 = vmatpush1.bf16.msra.mxu0 0
        %727 = vmatprep.subr.bf16.mxu0 0
        %728 = vmatpush1.bf16.msra.mxu0 0
        %729 = vmatprep.subr.bf16.mxu0 0
        %730 = vmatpush1.bf16.msra.mxu0 0
        %731 = vmatprep.subr.bf16.mxu0 0
        %732 = vmatpush1.bf16.msra.mxu0 0
        %733 = vmatprep.subr.bf16.mxu0 0
        %734 = vmatpush1.bf16.msra.mxu0 0
        %735 = vmatprep.subr.bf16.mxu0 0
        %736 = vmatpush1.bf16.msra.mxu0 0
        %737 = vmatprep.subr.bf16.mxu0 0
        %738 = vmatpush1.bf16.msra.mxu0 0
        %739 = vmatprep.subr.bf16.mxu0 0
        %740 = vmatpush1.bf16.msra.mxu0 0
        %741 = vmatprep.mubr.bf16.mxu0 0
        %742 = vmatmul.mubr.bf16.gmra.mrb[0].mxu0 %v704
        %v743 = vpop.f32.mrb[0].mxu0
        %v744 = vadd.f32 %v675, %v743
        %v745 = vpop.f32.mrb[0].mxu0
        %v746 = vadd.f32 %v675, %v745
        %v747 = vpop.f32.mrb[0].mxu0
        %v748 = vadd.f32 %v680, %v747
        %v749 = vpop.f32.mrb[0].mxu0
        %v750 = vadd.f32 %v680, %v749
        %751 = vmatprep.mubr.bf16.mxu0 0
        %752 = vmatmul.mubr.bf16.gmra.mrb[0].mxu0 %v707
        %v753 = vpop.f32.mrb[0].mxu0
        %v754 = vadd.f32 %v685, %v753
        %v755 = vpop.f32.mrb[0].mxu0
        %v756 = vadd.f32 %v685, %v755
        %v757 = vpop.f32.mrb[0].mxu0
        %v758 = vadd.f32 %v690, %v757
        %v759 = vpop.f32.mrb[0].mxu0
        %v760 = vadd.f32 %v690, %v759
        %761 = vdwg.mxu0
        %762 = vmatprep.subr.bf16.mxu0 %v667
        %763 = vmatpush1.bf16.msra.mxu0 %v666
        %764 = vmatprep.subr.bf16.mxu0 0
        %765 = vmatpush1.bf16.msra.mxu0 0
        %766 = vmatprep.subr.bf16.mxu0 0
        %767 = vmatpush1.bf16.msra.mxu0 0
        %768 = vmatprep.subr.bf16.mxu0 0
        %769 = vmatpush1.bf16.msra.mxu0 0
        %770 = vmatprep.subr.bf16.mxu0 0
        %771 = vmatpush1.bf16.msra.mxu0 0
        %772 = vmatprep.subr.bf16.mxu0 0
        %773 = vmatpush1.bf16.msra.mxu0 0
        %774 = vmatprep.subr.bf16.mxu0 0
        %775 = vmatpush1.bf16.msra.mxu0 0
        %776 = vmatprep.subr.bf16.mxu0 0
        %777 = vmatpush1.bf16.msra.mxu0 0
        %778 = vmatprep.subr.bf16.mxu0 0
        %779 = vmatpush1.bf16.msra.mxu0 0
        %780 = vmatprep.subr.bf16.mxu0 0
        %781 = vmatpush1.bf16.msra.mxu0 0
        %782 = vmatprep.subr.bf16.mxu0 0
        %783 = vmatpush1.bf16.msra.mxu0 0
        %784 = vmatprep.subr.bf16.mxu0 0
        %785 = vmatpush1.bf16.msra.mxu0 0
        %786 = vmatprep.subr.bf16.mxu0 0
        %787 = vmatpush1.bf16.msra.mxu0 0
        %788 = vmatprep.subr.bf16.mxu0 0
        %789 = vmatpush1.bf16.msra.mxu0 0
        %790 = vmatprep.subr.bf16.mxu0 0
        %791 = vmatpush1.bf16.msra.mxu0 0
        %792 = vmatprep.subr.bf16.mxu0 0
        %793 = vmatpush1.bf16.msra.mxu0 0
        %794 = vmatprep.mubr.bf16.mxu0 0
        %795 = vmatmul.mubr.bf16.gmra.mrb[0].mxu0 %v704
        %v796 = vpop.f32.mrb[0].mxu0
        %v797 = vadd.f32 %v675, %v796
        %v798 = vpop.f32.mrb[0].mxu0
        %v799 = vadd.f32 %v675, %v798
        %v800 = vpop.f32.mrb[0].mxu0
        %v801 = vadd.f32 %v680, %v800
        %v802 = vpop.f32.mrb[0].mxu0
        %v803 = vadd.f32 %v680, %v802
        %804 = vmatprep.mubr.bf16.mxu0 0
        %805 = vmatmul.mubr.bf16.gmra.mrb[0].mxu0 %v707
        %v806 = vpop.f32.mrb[0].mxu0
        %v807 = vadd.f32 %v685, %v806
        %v808 = vpop.f32.mrb[0].mxu0
        %v809 = vadd.f32 %v685, %v808
        %v810 = vpop.f32.mrb[0].mxu0
        %v811 = vadd.f32 %v690, %v810
        %v812 = vpop.f32.mrb[0].mxu0
        %v813 = vadd.f32 %v690, %v812
        %814 = vdwg.mxu0
        %v815 = vmax.f32 %v744, 0.0
        %v816 = vmax.f32 %v746, 0.0
        %v817 = vmax.f32 %v797, 0.0
        %v818 = vmax.f32 %v799, 0.0
        %v819 = vmax.f32 %v748, 0.0
        %v820 = vmax.f32 %v750, 0.0
        %v821 = vmax.f32 %v801, 0.0
        %v822 = vmax.f32 %v803, 0.0
        %v823 = vmax.f32 %v754, 0.0
        %v824 = vmax.f32 %v756, 0.0
        %v825 = vmax.f32 %v807, 0.0
        %v826 = vmax.f32 %v809, 0.0
        %v827 = vmax.f32 %v758, 0.0
        %v828 = vmax.f32 %v760, 0.0
        %v829 = vmax.f32 %v811, 0.0
        %v830 = vmax.f32 %v813, 0.0
        %v831 = vld [vmem:[%s6] sm:$0xf]
        %v832 = vld [vmem:[%s6 + $0x4] sm:$0xf]
        %v833 = vpack.c.bf16 %v819, %v815
        %v834 = vpack.c.bf16 %v820, %v816
        %v835 = vpack.c.bf16 %v821, %v817
        %v836 = vpack.c.bf16 %v822, %v818
        %v837 = vpack.c.bf16 %v827, %v823
        %v838 = vpack.c.bf16 %v828, %v824
        %v839 = vpack.c.bf16 %v829, %v825
        %v840 = vpack.c.bf16 %v830, %v826
        %v841 = vld [vmem:[%s7] sm:$0xff]
        %v842 = vld [vmem:[%s7 + $0x8] sm:$0xff]
        %844 = vset.pattern.permute.xlu0 0
        %845 = vperm.xlu0 %844, %v841
        %v846 = vpop.permute.xlu0 %845
        %849 = vset.pattern.permute.xlu0 0
        %850 = vperm.xlu0 %849, %v842
        %v851 = vpop.permute.xlu0 %850
        %v855 = vunpack.c.l.b16 %v831
        %v856 = vunpack.c.l.b16 %v832
        %v857 = vpack.c.b16 %v856, %v855
        %vm858 = vcmask 261120
        %v860 = vsel %vm858, %v857, 0
        %862 = vmatprep.subr.bf16.mxu0 %v834
        %863 = vmatpush1.bf16.msra.mxu0 %v833
        %864 = vmatprep.subr.bf16.mxu0 %v838
        %865 = vmatpush1.bf16.msra.mxu0 %v837
        %866 = vmatprep.subr.bf16.mxu0 0
        %867 = vmatpush1.bf16.msra.mxu0 0
        %868 = vmatprep.subr.bf16.mxu0 0
        %869 = vmatpush1.bf16.msra.mxu0 0
        %870 = vmatprep.subr.bf16.mxu0 0
        %871 = vmatpush1.bf16.msra.mxu0 0
        %872 = vmatprep.subr.bf16.mxu0 0
        %873 = vmatpush1.bf16.msra.mxu0 0
        %874 = vmatprep.subr.bf16.mxu0 0
        %875 = vmatpush1.bf16.msra.mxu0 0
        %876 = vmatprep.subr.bf16.mxu0 0
        %877 = vmatpush1.bf16.msra.mxu0 0
        %878 = vmatprep.subr.bf16.mxu0 0
        %879 = vmatpush1.bf16.msra.mxu0 0
        %880 = vmatprep.subr.bf16.mxu0 0
        %881 = vmatpush1.bf16.msra.mxu0 0
        %882 = vmatprep.subr.bf16.mxu0 0
        %883 = vmatpush1.bf16.msra.mxu0 0
        %884 = vmatprep.subr.bf16.mxu0 0
        %885 = vmatpush1.bf16.msra.mxu0 0
        %886 = vmatprep.subr.bf16.mxu0 0
        %887 = vmatpush1.bf16.msra.mxu0 0
        %888 = vmatprep.subr.bf16.mxu0 0
        %889 = vmatpush1.bf16.msra.mxu0 0
        %890 = vmatprep.subr.bf16.mxu0 0
        %891 = vmatpush1.bf16.msra.mxu0 0
        %892 = vmatprep.subr.bf16.mxu0 0
        %893 = vmatpush1.bf16.msra.mxu0 0
        %894 = vmatprep.mubr.bf16.mxu0 0
        %895 = vmatmul.mubr.bf16.gmra.mrb[0].mxu0 %v860
        %v896 = vpop.f32.mrb[0].mxu0
        %v897 = vadd.f32 %v846, %v896
        %v898 = vpop.f32.mrb[0].mxu0
        %v899 = vadd.f32 %v846, %v898
        %v900 = vpop.f32.mrb[0].mxu0
        %v901 = vadd.f32 %v851, %v900
        %v902 = vpop.f32.mrb[0].mxu0
        %v903 = vadd.f32 %v851, %v902
        %904 = vdwg.mxu0
        %905 = vmatprep.subr.bf16.mxu0 %v836
        %906 = vmatpush1.bf16.msra.mxu0 %v835
        %907 = vmatprep.subr.bf16.mxu0 %v840
        %908 = vmatpush1.bf16.msra.mxu0 %v839
        %909 = vmatprep.subr.bf16.mxu0 0
        %910 = vmatpush1.bf16.msra.mxu0 0
        %911 = vmatprep.subr.bf16.mxu0 0
        %912 = vmatpush1.bf16.msra.mxu0 0
        %913 = vmatprep.subr.bf16.mxu0 0
        %914 = vmatpush1.bf16.msra.mxu0 0
        %915 = vmatprep.subr.bf16.mxu0 0
        %916 = vmatpush1.bf16.msra.mxu0 0
        %917 = vmatprep.subr.bf16.mxu0 0
        %918 = vmatpush1.bf16.msra.mxu0 0
        %919 = vmatprep.subr.bf16.mxu0 0
        %920 = vmatpush1.bf16.msra.mxu0 0
        %921 = vmatprep.subr.bf16.mxu0 0
        %922 = vmatpush1.bf16.msra.mxu0 0
        %923 = vmatprep.subr.bf16.mxu0 0
        %924 = vmatpush1.bf16.msra.mxu0 0
        %925 = vmatprep.subr.bf16.mxu0 0
        %926 = vmatpush1.bf16.msra.mxu0 0
        %927 = vmatprep.subr.bf16.mxu0 0
        %928 = vmatpush1.bf16.msra.mxu0 0
        %929 = vmatprep.subr.bf16.mxu0 0
        %930 = vmatpush1.bf16.msra.mxu0 0
        %931 = vmatprep.subr.bf16.mxu0 0
        %932 = vmatpush1.bf16.msra.mxu0 0
        %933 = vmatprep.subr.bf16.mxu0 0
        %934 = vmatpush1.bf16.msra.mxu0 0
        %935 = vmatprep.subr.bf16.mxu0 0
        %936 = vmatpush1.bf16.msra.mxu0 0
        %937 = vmatprep.mubr.bf16.mxu0 0
        %938 = vmatmul.mubr.bf16.gmra.mrb[0].mxu0 %v860
        %v939 = vpop.f32.mrb[0].mxu0
        %v940 = vadd.f32 %v846, %v939
        %v941 = vpop.f32.mrb[0].mxu0
        %v942 = vadd.f32 %v846, %v941
        %v943 = vpop.f32.mrb[0].mxu0
        %v944 = vadd.f32 %v851, %v943
        %v945 = vpop.f32.mrb[0].mxu0
        %v946 = vadd.f32 %v851, %v945
        %947 = vdwg.mxu0
        %v948 = vadd.f32 %v897, %v389
        %v949 = vadd.f32 %v899, %v390
        %v950 = vadd.f32 %v940, %v391
        %v951 = vadd.f32 %v942, %v392
        %v952 = vadd.f32 %v901, %v393
        %v953 = vadd.f32 %v903, %v394
        %v954 = vadd.f32 %v944, %v395
        %v955 = vadd.f32 %v946, %v396
        %v956 = vpack.c.bf16 %v952, %v948
        %v957 = vpack.c.bf16 %v953, %v949
        %v958 = vpack.c.bf16 %v954, %v950
        %v959 = vpack.c.bf16 %v955, %v951
        %v964 = vunpack.c.l.b16 %v956
        %v965 = vunpack.c.l.b16 %v957
        %v966 = vunpack.c.l.b16 %v958
        %v967 = vunpack.c.l.b16 %v959
        %v968 = vunpack.c.h.b16 %v956
        %v969 = vunpack.c.h.b16 %v957
        %v970 = vunpack.c.h.b16 %v958
        %v971 = vunpack.c.h.b16 %v959
        %v972 = vpack.c.b16 %v965, %v964
        %v973 = vpack.c.b16 %v967, %v966
        %v974 = vpack.c.b16 %v969, %v968
        %v975 = vpack.c.b16 %v971, %v970
        %980 = vst [vmem:[%s372] sm:$0xff] %v972
        %981 = vst [vmem:[%s372 + $0x8] sm:$0xff] %v973
        %982 = vst [vmem:[%s372 + $0x10] sm:$0xff] %v974
        %983 = vst [vmem:[%s372 + $0x18] sm:$0xff] %v975
        %s984 = sand.u32 %s226, 1
        %s985 = scalar_lea.sflag [#allocation5], %s984
        %s986 = sand.u32 %s226, 1
        %s987 = smul.addr %s986, 32
        %s988 = scalar_lea.vmem [#allocation4], %s987
        // Predicated region
        $region76: #{tpu_custom_call.1} parent=70 // pred_check
          %p989 = pneg %p236
        $region77: #{tpu_custom_call.1} parent=70 // pred_check_branch
          %991 = sbr.rel (%p989) target = $region79
        $region78: #{tpu_custom_call.1} parent=70 // pred_region
          %s992 = smul.u32 4, %s27
          %s994 = ssub.s32 512, 512
          %995 = vsyncadd %s985, %s994
          %s996 = smul.addr %s26, 16
          %s997 = sadd.s32 %s992, %s996
          %s998 = smul.addr %s997, 64
          %s999 = scalar_lea.hbm %s8, %s998
          %s1000 = sshll.u32 %s988, 4
          %s1001 = int_to_ptr.vmem [resolvable:$true] %s1000
          %1006 = dma.vmem_to_hbm [thread:$0]  %s1001, 512, %s999, %s985, 256, 512, 16
        $region79: #{tpu_custom_call.1} parent=70 // pred_fallthru
          _
      $region71: #{tpu_custom_call.1} parent=5 // pred_fallthru
        _
      %p1007 = scmp.le.s32.totalorder 2, %s17
      // Predicated region
      $region80: #{tpu_custom_call.1} parent=5 // pred_check
        %p1008 = pneg %p1007
      $region81: #{tpu_custom_call.1} parent=5 // pred_check_branch
        %1010 = sbr.rel (%p1008) target = $region83
      $region82: #{tpu_custom_call.1} parent=5 // pred_region
        %s1011 = ssub.s32 %s17, 2
        // Predicated region
        $region84: #{tpu_custom_call.1} parent=82 // pred_check
          %p1012 = pneg %p242
        $region85: #{tpu_custom_call.1} parent=82 // pred_check_branch
          %1014 = sbr.rel (%p1012) target = $region87
        $region86: #{tpu_custom_call.1} parent=82 // pred_region
          %s1015 = sand.u32 %s227, 1
          %s1016 = scalar_lea.sflag [#allocation5], %s1015
          %s1017 = sand.u32 %s227, 1
          %s1018 = smul.addr %s1017, 32
          %s1019 = scalar_lea.vmem [#allocation4], %s1018
          %1020 = dma.done %s1016, 512
        $region87: #{tpu_custom_call.1} parent=82 // pred_fallthru
          _
      $region83: #{tpu_custom_call.1} parent=5 // pred_fallthru
        _
    $region6: #{tpu_custom_call.1} parent=1 // loop_footer
      %s21 = sadd.s32 1, %s17
    $region7: #{tpu_custom_call.1} parent=1 // loop_footer_branch
      %16 = sbr.rel target = $region3
    $region8: #{tpu_custom_call.1} parent=1 // loop_exit
      _
    %1021 = vsyncpa [#allocation5], 1
    %s1022 = scalar_lea.sflag [#allocation5], 1
    %1023 = vsyncpa %s1022, 1

</llo_original>
